<compile_context>
chip_gen: v7x
topology: tpu7x:2x2x1
jax: 0.10.0
libtpu: 0.0.40
codegen_flags: <defaults>
</compile_context>

<pallas_src>
import functools

import jax
import jax.numpy as jnp
from jax import lax
from jax.experimental import pallas as pl
from jax.experimental.pallas import tpu as pltpu

BATCH = 4          # batch_size of the module
DIM = 32           # embedding dim
TEMPERATURE = 0.5  # registered buffer value

_LANE = 128


def _round_up(x, m):
    return ((x + m - 1) // m) * m


def _pick_group_tile(g):
    """Groups per grid step (always a multiple of 128 so lanes stay dense)."""
    if g <= 512:
        return _round_up(g, _LANE)   # single step, minimal padding
    if g <= 4096:
        return 256                   # grid >= 2 -> v7x megacore can shard it
    return 512                       # ~0.5 MiB input tiles per step


def _sum_leading(x):
    """Sum over the leading (untiled) axis, unrolled -> trivially lowerable."""
    acc = x[0:1]
    for a in range(1, x.shape[0]):
        acc = acc + x[a:a + 1]
    return acc


def _gcl_kernel(emb_i_ref, emb_j_ref, out_ref, *, inv_tau, batch):
    # Blocks are (B, D, GT): D on sublanes, GT groups on lanes (full vregs).
    ei = emb_i_ref[...].astype(jnp.float32)
    ej = emb_j_ref[...].astype(jnp.float32)

    # F.normalize(dim=1), eps=1e-12:  x * rsqrt(max(||x||^2, 1e-24)).
    zi = ei * lax.rsqrt(jnp.maximum(jnp.sum(ei * ei, axis=1, keepdims=True), 1e-24))
    zj = ej * lax.rsqrt(jnp.maximum(jnp.sum(ej * ej, axis=1, keepdims=True), 1e-24))

    itau = jnp.float32(inv_tau)
    pos_scale = jnp.float32(inv_tau / (batch - 1))    # folded 1/tau * 1/(B-1)

    # Positive terms: off-diag row sums of the within-view Gram,
    #   sum_{s != r} z_r . z_s = z_r . (colsum(z) - z_r)
    # (exact even for degenerate all-zero rows).
    colsum_i = _sum_leading(zi)                                        # (1, D, GT)
    colsum_j = _sum_leading(zj)                                        # (1, D, GT)
    nom_i = jnp.exp(jnp.sum(zi * (colsum_i - zi), axis=1, keepdims=True)
                    * pos_scale)                                       # (B, 1, GT)
    nom_j = jnp.exp(jnp.sum(zj * (colsum_j - zj), axis=1, keepdims=True)
                    * pos_scale)                                       # (B, 1, GT)

    # Denominators: row / column sums of exp(sim_ij / tau) with
    #   sim_ij[a, b, g] = zi[a, :, g] . zj[b, :, g];   sim_ji = sim_ij.T.
    # Unrolled over b (B is a small compile-time constant).
    den_i = jnp.zeros_like(nom_i)                                      # (B, 1, GT)
    acc_j = jnp.zeros((1, 1, nom_j.shape[-1]), jnp.float32)            # (1, 1, GT)
    for b in range(batch):
        zj_b = zj[b:b + 1]                                             # (1, D, GT)
        e_b = jnp.exp(jnp.sum(zi * zj_b, axis=1, keepdims=True) * itau)  # (B,1,GT)
        den_i = den_i + e_b
        den_j_b = _sum_leading(e_b)                                    # (1, 1, GT)
        nom_j_b = nom_j[b:b + 1]                                       # (1, 1, GT)
        acc_j = acc_j + nom_j_b / (nom_j_b + den_j_b)
    acc_i = _sum_leading(nom_i / (nom_i + den_i))                      # (1, 1, GT)

    loss = -jnp.log((acc_i + acc_j) * jnp.float32(1.0 / (2 * batch)))  # (1, 1, GT)
    out_ref[...] = loss[0]                                             # (1, GT)


def group_contrastive_loss_batched(emb_i, emb_j, temperature=TEMPERATURE,
                                   group_tile=None):
    """(G, B, D) stacks of independent pairs -> (G,) losses."""
    g, b, d = emb_i.shape
    gt = _pick_group_tile(g) if group_tile is None else group_tile
    gp = _round_up(g, gt)

    # Layout plumbing: groups -> lane axis; pad G up to a tile multiple.
    # Zero-padded groups stay finite (eps-guarded rsqrt + degenerate-row-safe
    # positive term) and their lanes are sliced off below.
    xi = jnp.transpose(emb_i, (1, 2, 0))        # (B, D, G)
    xj = jnp.transpose(emb_j, (1, 2, 0))
    if gp != g:
        xi = jnp.pad(xi, ((0, 0), (0, 0), (0, gp - g)))
        xj = jnp.pad(xj, ((0, 0), (0, 0), (0, gp - g)))

    kernel = functools.partial(_gcl_kernel, inv_tau=1.0 / float(temperature),
                               batch=b)
    out = pl.pallas_call(
        kernel,
        out_shape=jax.ShapeDtypeStruct((1, gp), jnp.float32),
        grid=(gp // gt,),
        in_specs=[
            pl.BlockSpec((b, d, gt), lambda i: (0, 0, i)),
            pl.BlockSpec((b, d, gt), lambda i: (0, 0, i)),
        ],
        out_specs=pl.BlockSpec((1, gt), lambda i: (0, i)),
        compiler_params=pltpu.CompilerParams(
            dimension_semantics=("parallel",),
            # Explicit budget: 2 inputs x 2 pipeline buffers x (B*D*GT*4) bytes
            # is well under this on every generation (v5e/v6e/v7x).
            vmem_limit_bytes=32 * 1024 * 1024,
        ),
    )(xi, xj)
    return out[0, :g]


def group_contrastive_loss(emb_i, emb_j, temperature=TEMPERATURE):
    """Single (B, D) pair -> scalar loss (routed through the packed path)."""
    return group_contrastive_loss_batched(emb_i[None], emb_j[None], temperature)[0]


def reference_loss(emb_i, emb_j, temperature=TEMPERATURE):
    # Plain-JAX transcription of the PyTorch forward (for verification).
    b = emb_i.shape[0]
    zi = emb_i / jnp.maximum(jnp.linalg.norm(emb_i, axis=1, keepdims=True), 1e-12)
    zj = emb_j / jnp.maximum(jnp.linalg.norm(emb_j, axis=1, keepdims=True), 1e-12)
    reps = jnp.concatenate([zi, zj], axis=0)
    sim = reps @ reps.T
    pm = 1.0 - jnp.eye(b)
    sim_ij = jnp.sum(sim[:b, :b] * pm, axis=1) / (b - 1)
    sim_ji = jnp.sum(sim[b:, b:] * pm, axis=1) / (b - 1)
    positives = jnp.concatenate([sim_ij, sim_ji], axis=0)
    nom = jnp.exp(positives / temperature)
    nm = (jnp.zeros((2 * b, 2 * b))
          .at[:b, b:].set(1.0)
          .at[b:, :b].set(1.0))
    den = jnp.sum(nm * jnp.exp(sim / temperature), axis=1)
    loss_partial = jnp.sum(nom / (nom + den)) / (2 * b)
    return -jnp.log(loss_partial)


if __name__ == "__main__":
    key = jax.random.PRNGKey(0)
    ki, kj, kbi, kbj = jax.random.split(key, 4)

    # Single-pair path (module semantics).
    emb_i = jax.random.normal(ki, (BATCH, DIM), dtype=jnp.float32)
    emb_j = jax.random.normal(kj, (BATCH, DIM), dtype=jnp.float32)
    loss = jax.block_until_ready(group_contrastive_loss(emb_i, emb_j))
    ref = jax.block_until_ready(reference_loss(emb_i, emb_j))
    if not bool(jnp.allclose(loss, ref, atol=3e-5, rtol=3e-5)):
        raise AssertionError(f"single mismatch: kernel={loss} ref={ref}")

    # Batched / packed path (many independent loss instances per grid step).
    G = 8
    bi = jax.random.normal(kbi, (G, BATCH, DIM), dtype=jnp.float32)
    bj = jax.random.normal(kbj, (G, BATCH, DIM), dtype=jnp.float32)
    losses = jax.block_until_ready(group_contrastive_loss_batched(bi, bj))
    refs = jax.block_until_ready(jax.vmap(reference_loss)(bi, bj))
    if not bool(jnp.allclose(losses, refs, atol=3e-5, rtol=3e-5)):
        raise AssertionError(f"batched mismatch: kernel={losses} ref={refs}")

    print("KERNEL_OK")
</pallas_src>

<mosaic_0001>
module attributes {stable_mosaic.version = 11 : i64} {
  func.func @_gcl_kernel(%arg0: i32, %arg1: memref<4x32x128xf32, #tpu.memory_space<vmem>>, %arg2: memref<4x32x128xf32, #tpu.memory_space<vmem>>, %arg3: memref<1x128xf32, #tpu.memory_space<vmem>>) attributes {dimension_semantics = [#tpu.dimension_semantics<parallel>], iteration_bounds = array<i64: 1>, scalar_prefetch = 0 : i64, scratch_operands = 0 : i64, tpu.core_type = #tpu.core_type<tc>, window_params = [{transform_indices = @transform_0, window_bounds = array<i64: 4, 32, 128>}, {transform_indices = @transform_1, window_bounds = array<i64: 4, 32, 128>}, {transform_indices = @transform_2, window_bounds = array<i64: 1, 128>}]} {
    %c0 = arith.constant 0 : index
    %c0_0 = arith.constant 0 : index
    %c0_1 = arith.constant 0 : index
    %0 = vector.load %arg1[%c0, %c0_0, %c0_1] : memref<4x32x128xf32, #tpu.memory_space<vmem>>, vector<4x32x128xf32>
    %c0_2 = arith.constant 0 : index
    %c0_3 = arith.constant 0 : index
    %c0_4 = arith.constant 0 : index
    %1 = vector.load %arg2[%c0_2, %c0_3, %c0_4] : memref<4x32x128xf32, #tpu.memory_space<vmem>>, vector<4x32x128xf32>
    %2 = arith.mulf %0, %0 : vector<4x32x128xf32>
    %cst = arith.constant dense<0.000000e+00> : vector<4x128xf32>
    %3 = vector.multi_reduction <add>, %2, %cst [1] : vector<4x32x128xf32> to vector<4x128xf32>
    %4 = vector.shape_cast %3 : vector<4x128xf32> to vector<4x1x128xf32>
    %cst_5 = arith.constant 1.000000e-24 : f32
    %5 = vector.broadcast %cst_5 : f32 to vector<4x1x128xf32>
    %6 = arith.maximumf %4, %5 : vector<4x1x128xf32>
    %7 = math.rsqrt %6 : vector<4x1x128xf32>
    %8 = vector.broadcast %7 : vector<4x1x128xf32> to vector<4x32x128xf32>
    %9 = arith.mulf %0, %8 : vector<4x32x128xf32>
    %10 = arith.mulf %1, %1 : vector<4x32x128xf32>
    %cst_6 = arith.constant dense<0.000000e+00> : vector<4x128xf32>
    %11 = vector.multi_reduction <add>, %10, %cst_6 [1] : vector<4x32x128xf32> to vector<4x128xf32>
    %12 = vector.shape_cast %11 : vector<4x128xf32> to vector<4x1x128xf32>
    %cst_7 = arith.constant 1.000000e-24 : f32
    %13 = vector.broadcast %cst_7 : f32 to vector<4x1x128xf32>
    %14 = arith.maximumf %12, %13 : vector<4x1x128xf32>
    %15 = math.rsqrt %14 : vector<4x1x128xf32>
    %16 = vector.broadcast %15 : vector<4x1x128xf32> to vector<4x32x128xf32>
    %17 = arith.mulf %1, %16 : vector<4x32x128xf32>
    %18 = vector.extract_strided_slice %9 {offsets = [0, 0, 0], sizes = [1, 32, 128], strides = [1, 1, 1]} : vector<4x32x128xf32> to vector<1x32x128xf32>
    %19 = vector.extract_strided_slice %9 {offsets = [1, 0, 0], sizes = [1, 32, 128], strides = [1, 1, 1]} : vector<4x32x128xf32> to vector<1x32x128xf32>
    %20 = arith.addf %18, %19 : vector<1x32x128xf32>
    %21 = vector.extract_strided_slice %9 {offsets = [2, 0, 0], sizes = [1, 32, 128], strides = [1, 1, 1]} : vector<4x32x128xf32> to vector<1x32x128xf32>
    %22 = arith.addf %20, %21 : vector<1x32x128xf32>
    %23 = vector.extract_strided_slice %9 {offsets = [3, 0, 0], sizes = [1, 32, 128], strides = [1, 1, 1]} : vector<4x32x128xf32> to vector<1x32x128xf32>
    %24 = arith.addf %22, %23 : vector<1x32x128xf32>
    %25 = vector.extract_strided_slice %17 {offsets = [0, 0, 0], sizes = [1, 32, 128], strides = [1, 1, 1]} : vector<4x32x128xf32> to vector<1x32x128xf32>
    %26 = vector.extract_strided_slice %17 {offsets = [1, 0, 0], sizes = [1, 32, 128], strides = [1, 1, 1]} : vector<4x32x128xf32> to vector<1x32x128xf32>
    %27 = arith.addf %25, %26 : vector<1x32x128xf32>
    %28 = vector.extract_strided_slice %17 {offsets = [2, 0, 0], sizes = [1, 32, 128], strides = [1, 1, 1]} : vector<4x32x128xf32> to vector<1x32x128xf32>
    %29 = arith.addf %27, %28 : vector<1x32x128xf32>
    %30 = vector.extract_strided_slice %17 {offsets = [3, 0, 0], sizes = [1, 32, 128], strides = [1, 1, 1]} : vector<4x32x128xf32> to vector<1x32x128xf32>
    %31 = arith.addf %29, %30 : vector<1x32x128xf32>
    %32 = vector.broadcast %24 : vector<1x32x128xf32> to vector<4x32x128xf32>
    %33 = arith.subf %32, %9 : vector<4x32x128xf32>
    %34 = arith.mulf %9, %33 : vector<4x32x128xf32>
    %cst_8 = arith.constant dense<0.000000e+00> : vector<4x128xf32>
    %35 = vector.multi_reduction <add>, %34, %cst_8 [1] : vector<4x32x128xf32> to vector<4x128xf32>
    %36 = vector.shape_cast %35 : vector<4x128xf32> to vector<4x1x128xf32>
    %cst_9 = arith.constant 0.666666686 : f32
    %37 = vector.broadcast %cst_9 : f32 to vector<4x1x128xf32>
    %38 = arith.mulf %36, %37 : vector<4x1x128xf32>
    %39 = math.exp %38 : vector<4x1x128xf32>
    %40 = vector.broadcast %31 : vector<1x32x128xf32> to vector<4x32x128xf32>
    %41 = arith.subf %40, %17 : vector<4x32x128xf32>
    %42 = arith.mulf %17, %41 : vector<4x32x128xf32>
    %cst_10 = arith.constant dense<0.000000e+00> : vector<4x128xf32>
    %43 = vector.multi_reduction <add>, %42, %cst_10 [1] : vector<4x32x128xf32> to vector<4x128xf32>
    %44 = vector.shape_cast %43 : vector<4x128xf32> to vector<4x1x128xf32>
    %cst_11 = arith.constant 0.666666686 : f32
    %45 = vector.broadcast %cst_11 : f32 to vector<4x1x128xf32>
    %46 = arith.mulf %44, %45 : vector<4x1x128xf32>
    %47 = math.exp %46 : vector<4x1x128xf32>
    %cst_12 = arith.constant 0.000000e+00 : f32
    %48 = vector.broadcast %cst_12 : f32 to vector<4x1x128xf32>
    %cst_13 = arith.constant 0.000000e+00 : f32
    %49 = vector.broadcast %cst_13 : f32 to vector<1x1x128xf32>
    %50 = vector.extract_strided_slice %17 {offsets = [0, 0, 0], sizes = [1, 32, 128], strides = [1, 1, 1]} : vector<4x32x128xf32> to vector<1x32x128xf32>
    %51 = vector.broadcast %50 : vector<1x32x128xf32> to vector<4x32x128xf32>
    %52 = arith.mulf %9, %51 : vector<4x32x128xf32>
    %cst_14 = arith.constant dense<0.000000e+00> : vector<4x128xf32>
    %53 = vector.multi_reduction <add>, %52, %cst_14 [1] : vector<4x32x128xf32> to vector<4x128xf32>
    %54 = vector.shape_cast %53 : vector<4x128xf32> to vector<4x1x128xf32>
    %cst_15 = arith.constant 2.000000e+00 : f32
    %55 = vector.broadcast %cst_15 : f32 to vector<4x1x128xf32>
    %56 = arith.mulf %54, %55 : vector<4x1x128xf32>
    %57 = math.exp %56 : vector<4x1x128xf32>
    %58 = arith.addf %48, %57 : vector<4x1x128xf32>
    %59 = vector.extract_strided_slice %57 {offsets = [0, 0, 0], sizes = [1, 1, 128], strides = [1, 1, 1]} : vector<4x1x128xf32> to vector<1x1x128xf32>
    %60 = vector.extract_strided_slice %57 {offsets = [1, 0, 0], sizes = [1, 1, 128], strides = [1, 1, 1]} : vector<4x1x128xf32> to vector<1x1x128xf32>
    %61 = arith.addf %59, %60 : vector<1x1x128xf32>
    %62 = vector.extract_strided_slice %57 {offsets = [2, 0, 0], sizes = [1, 1, 128], strides = [1, 1, 1]} : vector<4x1x128xf32> to vector<1x1x128xf32>
    %63 = arith.addf %61, %62 : vector<1x1x128xf32>
    %64 = vector.extract_strided_slice %57 {offsets = [3, 0, 0], sizes = [1, 1, 128], strides = [1, 1, 1]} : vector<4x1x128xf32> to vector<1x1x128xf32>
    %65 = arith.addf %63, %64 : vector<1x1x128xf32>
    %66 = vector.extract_strided_slice %47 {offsets = [0, 0, 0], sizes = [1, 1, 128], strides = [1, 1, 1]} : vector<4x1x128xf32> to vector<1x1x128xf32>
    %67 = arith.addf %66, %65 : vector<1x1x128xf32>
    %68 = arith.divf %66, %67 : vector<1x1x128xf32>
    %69 = arith.addf %49, %68 : vector<1x1x128xf32>
    %70 = vector.extract_strided_slice %17 {offsets = [1, 0, 0], sizes = [1, 32, 128], strides = [1, 1, 1]} : vector<4x32x128xf32> to vector<1x32x128xf32>
    %71 = vector.broadcast %70 : vector<1x32x128xf32> to vector<4x32x128xf32>
    %72 = arith.mulf %9, %71 : vector<4x32x128xf32>
    %cst_16 = arith.constant dense<0.000000e+00> : vector<4x128xf32>
    %73 = vector.multi_reduction <add>, %72, %cst_16 [1] : vector<4x32x128xf32> to vector<4x128xf32>
    %74 = vector.shape_cast %73 : vector<4x128xf32> to vector<4x1x128xf32>
    %cst_17 = arith.constant 2.000000e+00 : f32
    %75 = vector.broadcast %cst_17 : f32 to vector<4x1x128xf32>
    %76 = arith.mulf %74, %75 : vector<4x1x128xf32>
    %77 = math.exp %76 : vector<4x1x128xf32>
    %78 = arith.addf %58, %77 : vector<4x1x128xf32>
    %79 = vector.extract_strided_slice %77 {offsets = [0, 0, 0], sizes = [1, 1, 128], strides = [1, 1, 1]} : vector<4x1x128xf32> to vector<1x1x128xf32>
    %80 = vector.extract_strided_slice %77 {offsets = [1, 0, 0], sizes = [1, 1, 128], strides = [1, 1, 1]} : vector<4x1x128xf32> to vector<1x1x128xf32>
    %81 = arith.addf %79, %80 : vector<1x1x128xf32>
    %82 = vector.extract_strided_slice %77 {offsets = [2, 0, 0], sizes = [1, 1, 128], strides = [1, 1, 1]} : vector<4x1x128xf32> to vector<1x1x128xf32>
    %83 = arith.addf %81, %82 : vector<1x1x128xf32>
    %84 = vector.extract_strided_slice %77 {offsets = [3, 0, 0], sizes = [1, 1, 128], strides = [1, 1, 1]} : vector<4x1x128xf32> to vector<1x1x128xf32>
    %85 = arith.addf %83, %84 : vector<1x1x128xf32>
    %86 = vector.extract_strided_slice %47 {offsets = [1, 0, 0], sizes = [1, 1, 128], strides = [1, 1, 1]} : vector<4x1x128xf32> to vector<1x1x128xf32>
    %87 = arith.addf %86, %85 : vector<1x1x128xf32>
    %88 = arith.divf %86, %87 : vector<1x1x128xf32>
    %89 = arith.addf %69, %88 : vector<1x1x128xf32>
    %90 = vector.extract_strided_slice %17 {offsets = [2, 0, 0], sizes = [1, 32, 128], strides = [1, 1, 1]} : vector<4x32x128xf32> to vector<1x32x128xf32>
    %91 = vector.broadcast %90 : vector<1x32x128xf32> to vector<4x32x128xf32>
    %92 = arith.mulf %9, %91 : vector<4x32x128xf32>
    %cst_18 = arith.constant dense<0.000000e+00> : vector<4x128xf32>
    %93 = vector.multi_reduction <add>, %92, %cst_18 [1] : vector<4x32x128xf32> to vector<4x128xf32>
    %94 = vector.shape_cast %93 : vector<4x128xf32> to vector<4x1x128xf32>
    %cst_19 = arith.constant 2.000000e+00 : f32
    %95 = vector.broadcast %cst_19 : f32 to vector<4x1x128xf32>
    %96 = arith.mulf %94, %95 : vector<4x1x128xf32>
    %97 = math.exp %96 : vector<4x1x128xf32>
    %98 = arith.addf %78, %97 : vector<4x1x128xf32>
    %99 = vector.extract_strided_slice %97 {offsets = [0, 0, 0], sizes = [1, 1, 128], strides = [1, 1, 1]} : vector<4x1x128xf32> to vector<1x1x128xf32>
    %100 = vector.extract_strided_slice %97 {offsets = [1, 0, 0], sizes = [1, 1, 128], strides = [1, 1, 1]} : vector<4x1x128xf32> to vector<1x1x128xf32>
    %101 = arith.addf %99, %100 : vector<1x1x128xf32>
    %102 = vector.extract_strided_slice %97 {offsets = [2, 0, 0], sizes = [1, 1, 128], strides = [1, 1, 1]} : vector<4x1x128xf32> to vector<1x1x128xf32>
    %103 = arith.addf %101, %102 : vector<1x1x128xf32>
    %104 = vector.extract_strided_slice %97 {offsets = [3, 0, 0], sizes = [1, 1, 128], strides = [1, 1, 1]} : vector<4x1x128xf32> to vector<1x1x128xf32>
    %105 = arith.addf %103, %104 : vector<1x1x128xf32>
    %106 = vector.extract_strided_slice %47 {offsets = [2, 0, 0], sizes = [1, 1, 128], strides = [1, 1, 1]} : vector<4x1x128xf32> to vector<1x1x128xf32>
    %107 = arith.addf %106, %105 : vector<1x1x128xf32>
    %108 = arith.divf %106, %107 : vector<1x1x128xf32>
    %109 = arith.addf %89, %108 : vector<1x1x128xf32>
    %110 = vector.extract_strided_slice %17 {offsets = [3, 0, 0], sizes = [1, 32, 128], strides = [1, 1, 1]} : vector<4x32x128xf32> to vector<1x32x128xf32>
    %111 = vector.broadcast %110 : vector<1x32x128xf32> to vector<4x32x128xf32>
    %112 = arith.mulf %9, %111 : vector<4x32x128xf32>
    %cst_20 = arith.constant dense<0.000000e+00> : vector<4x128xf32>
    %113 = vector.multi_reduction <add>, %112, %cst_20 [1] : vector<4x32x128xf32> to vector<4x128xf32>
    %114 = vector.shape_cast %113 : vector<4x128xf32> to vector<4x1x128xf32>
    %cst_21 = arith.constant 2.000000e+00 : f32
    %115 = vector.broadcast %cst_21 : f32 to vector<4x1x128xf32>
    %116 = arith.mulf %114, %115 : vector<4x1x128xf32>
    %117 = math.exp %116 : vector<4x1x128xf32>
    %118 = arith.addf %98, %117 : vector<4x1x128xf32>
    %119 = vector.extract_strided_slice %117 {offsets = [0, 0, 0], sizes = [1, 1, 128], strides = [1, 1, 1]} : vector<4x1x128xf32> to vector<1x1x128xf32>
    %120 = vector.extract_strided_slice %117 {offsets = [1, 0, 0], sizes = [1, 1, 128], strides = [1, 1, 1]} : vector<4x1x128xf32> to vector<1x1x128xf32>
    %121 = arith.addf %119, %120 : vector<1x1x128xf32>
    %122 = vector.extract_strided_slice %117 {offsets = [2, 0, 0], sizes = [1, 1, 128], strides = [1, 1, 1]} : vector<4x1x128xf32> to vector<1x1x128xf32>
    %123 = arith.addf %121, %122 : vector<1x1x128xf32>
    %124 = vector.extract_strided_slice %117 {offsets = [3, 0, 0], sizes = [1, 1, 128], strides = [1, 1, 1]} : vector<4x1x128xf32> to vector<1x1x128xf32>
    %125 = arith.addf %123, %124 : vector<1x1x128xf32>
    %126 = vector.extract_strided_slice %47 {offsets = [3, 0, 0], sizes = [1, 1, 128], strides = [1, 1, 1]} : vector<4x1x128xf32> to vector<1x1x128xf32>
    %127 = arith.addf %126, %125 : vector<1x1x128xf32>
    %128 = arith.divf %126, %127 : vector<1x1x128xf32>
    %129 = arith.addf %109, %128 : vector<1x1x128xf32>
    %130 = arith.addf %39, %118 : vector<4x1x128xf32>
    %131 = arith.divf %39, %130 : vector<4x1x128xf32>
    %132 = vector.extract_strided_slice %131 {offsets = [0, 0, 0], sizes = [1, 1, 128], strides = [1, 1, 1]} : vector<4x1x128xf32> to vector<1x1x128xf32>
    %133 = vector.extract_strided_slice %131 {offsets = [1, 0, 0], sizes = [1, 1, 128], strides = [1, 1, 1]} : vector<4x1x128xf32> to vector<1x1x128xf32>
    %134 = arith.addf %132, %133 : vector<1x1x128xf32>
    %135 = vector.extract_strided_slice %131 {offsets = [2, 0, 0], sizes = [1, 1, 128], strides = [1, 1, 1]} : vector<4x1x128xf32> to vector<1x1x128xf32>
    %136 = arith.addf %134, %135 : vector<1x1x128xf32>
    %137 = vector.extract_strided_slice %131 {offsets = [3, 0, 0], sizes = [1, 1, 128], strides = [1, 1, 1]} : vector<4x1x128xf32> to vector<1x1x128xf32>
    %138 = arith.addf %136, %137 : vector<1x1x128xf32>
    %139 = arith.addf %138, %129 : vector<1x1x128xf32>
    %cst_22 = arith.constant 1.250000e-01 : f32
    %140 = vector.broadcast %cst_22 : f32 to vector<1x1x128xf32>
    %141 = arith.mulf %139, %140 : vector<1x1x128xf32>
    %142 = math.log %141 : vector<1x1x128xf32>
    %cst_23 = arith.constant 0.000000e+00 : f32
    %143 = vector.broadcast %cst_23 : f32 to vector<1x1x128xf32>
    %144 = arith.subf %143, %142 : vector<1x1x128xf32>
    %145 = vector.shape_cast %144 : vector<1x1x128xf32> to vector<1x128xf32>
    %c0_24 = arith.constant 0 : index
    %c0_25 = arith.constant 0 : index
    %146 = vector.load %arg3[%c0_24, %c0_25] : memref<1x128xf32, #tpu.memory_space<vmem>>, vector<1x128xf32>
    tpu.vector_store %arg3[%c0_24, %c0_25], %145 {strides = array<i32>} : memref<1x128xf32, #tpu.memory_space<vmem>>, vector<1x128xf32>,
    return
  }
  func.func @transform_0(%arg0: i32) -> (i32, i32, i32) {
    %c0_i32 = arith.constant 0 : i32
    %c0_i32_0 = arith.constant 0 : i32
    %c0_i32_1 = arith.constant 0 : i32
    return %c0_i32, %c0_i32_0, %arg0 : i32, i32, i32
  }
  func.func @transform_1(%arg0: i32) -> (i32, i32, i32) {
    %c0_i32 = arith.constant 0 : i32
    %c0_i32_0 = arith.constant 0 : i32
    %c0_i32_1 = arith.constant 0 : i32
    return %c0_i32, %c0_i32_0, %arg0 : i32, i32, i32
  }
  func.func @transform_2(%arg0: i32) -> (i32, i32) {
    %c0_i32 = arith.constant 0 : i32
    %c0_i32_0 = arith.constant 0 : i32
    return %c0_i32, %arg0 : i32, i32
  }
}

</mosaic_0001>

<llo_original>
// kernel: tpu_custom_call.1
$region0: #{tpu_custom_call.1}
  #allocation0 [shape = 'u32[]', space=smem, size = 0x4, offset = 0x4, fixed_abs, tag = 'smem constant byte address 0x4 - core index']
  #allocation1 [shape = 'u32[144,128]{1,0:T(1,128)}', space=vmem, size = 0x12000, scoped, tag = 'internal scratch']
  %s0 = inlined_call_operand.hbm [shape: f32[4,32,128], index: 0, kind: input, shape index: {}]
  %s1 = inlined_call_operand.hbm [shape: f32[4,32,128], index: 1, kind: input, shape index: {}]
  %s2 = inlined_call_operand.hbm [shape: f32[1,128], index: 2, kind: output, shape index: {}]
  %s3 = sld [smem:[#allocation0]]
  $region26: #{tpu_custom_call.1} parent=0
    _
  %s5 = ssub.s32 1, %s3
  %s6 = scalar_select 0, %s5, %s3
  $region1: #{tpu_custom_call.1} parent=0
    #allocation2 [shape = 'u8[65536]{0}', space=vmem, size = 0x10000, scoped, tag = 'input window, operand 0, single buffered']
    #allocation3 [shape = 's32[1]{0}', space=sflag, size = 0x4, scoped, tag = 'scoped memory for tpu_custom_call.1']
    #allocation4 [shape = 's32[1]{0}', space=sflag, size = 0x4, scoped, tag = 'scoped memory for tpu_custom_call.1']
    #allocation5 [shape = 'u8[65536]{0}', space=vmem, size = 0x10000, scoped, tag = 'input window, operand 1, single buffered']
    #allocation6 [shape = 's32[1]{0}', space=sflag, size = 0x4, scoped, tag = 'scoped memory for tpu_custom_call.1']
    #allocation7 [shape = 'u8[512]{0}', space=vmem, size = 0x400, scoped, tag = 'output window, operand 0, single buffered']
    %7 = vsyncpa [#allocation3], 0
    %8 = vsyncpa [#allocation6], 0
    %9 = vsyncpa [#allocation4], 0
    // Predicated region
    $region2: #{tpu_custom_call.1} parent=1 // pred_check
      _
    $region3: #{tpu_custom_call.1} parent=1 // pred_check_branch
      %11 = sbr.rel (0) target = $region5
    $region4: #{tpu_custom_call.1} parent=1 // pred_region
      %s13 = ssub.s32 2048, 2048
      %14 = vsyncadd [#allocation3], %s13
      %s15 = sshll.u32 [#allocation2], 4
      %s16 = int_to_ptr.vmem [resolvable:$true] %s15
      %21 = dma.hbm_to_vmem [thread:$0]  %s0, 2048, %s16, [#allocation3], 128, 128, 8
    $region5: #{tpu_custom_call.1} parent=1 // pred_fallthru
      _
    // Predicated region
    $region6: #{tpu_custom_call.1} parent=1 // pred_check
      _
    $region7: #{tpu_custom_call.1} parent=1 // pred_check_branch
      %23 = sbr.rel (0) target = $region9
    $region8: #{tpu_custom_call.1} parent=1 // pred_region
      %s25 = ssub.s32 2048, 2048
      %26 = vsyncadd [#allocation6], %s25
      %s27 = sshll.u32 [#allocation5], 4
      %s28 = int_to_ptr.vmem [resolvable:$true] %s27
      %33 = dma.hbm_to_vmem [thread:$0]  %s1, 2048, %s28, [#allocation6], 128, 128, 8
    $region9: #{tpu_custom_call.1} parent=1 // pred_fallthru
      _
    // Predicated region
    $region10: #{tpu_custom_call.1} parent=1 // pred_check
      _
    $region11: #{tpu_custom_call.1} parent=1 // pred_check_branch
      %35 = sbr.rel (0) target = $region13
    $region12: #{tpu_custom_call.1} parent=1 // pred_region
      %36 = dma.done [#allocation3], 2048
    $region13: #{tpu_custom_call.1} parent=1 // pred_fallthru
      _
    // Predicated region
    $region14: #{tpu_custom_call.1} parent=1 // pred_check
      _
    $region15: #{tpu_custom_call.1} parent=1 // pred_check_branch
      %38 = sbr.rel (0) target = $region17
    $region16: #{tpu_custom_call.1} parent=1 // pred_region
      %39 = dma.done [#allocation6], 2048
    $region17: #{tpu_custom_call.1} parent=1 // pred_fallthru
      _
    %v40 = vld [vmem:[#allocation2] sm:$0xff]
    %v41 = vld [vmem:[#allocation2 + $0x8] sm:$0xff]
    %v42 = vld [vmem:[#allocation2 + $0x10] sm:$0xff]
    %v43 = vld [vmem:[#allocation2 + $0x18] sm:$0xff]
    %v44 = vld [vmem:[#allocation2 + $0x20] sm:$0xff]
    %v45 = vld [vmem:[#allocation2 + $0x28] sm:$0xff]
    %v46 = vld [vmem:[#allocation2 + $0x30] sm:$0xff]
    %v47 = vld [vmem:[#allocation2 + $0x38] sm:$0xff]
    %v48 = vld [vmem:[#allocation2 + $0x40] sm:$0xff]
    %v49 = vld [vmem:[#allocation2 + $0x48] sm:$0xff]
    %v50 = vld [vmem:[#allocation2 + $0x50] sm:$0xff]
    %v51 = vld [vmem:[#allocation2 + $0x58] sm:$0xff]
    %v52 = vld [vmem:[#allocation2 + $0x60] sm:$0xff]
    %v53 = vld [vmem:[#allocation2 + $0x68] sm:$0xff]
    %v54 = vld [vmem:[#allocation2 + $0x70] sm:$0xff]
    %v55 = vld [vmem:[#allocation2 + $0x78] sm:$0xff]
    %v56 = vld [vmem:[#allocation5] sm:$0xff]
    %v57 = vld [vmem:[#allocation5 + $0x8] sm:$0xff]
    %v58 = vld [vmem:[#allocation5 + $0x10] sm:$0xff]
    %v59 = vld [vmem:[#allocation5 + $0x18] sm:$0xff]
    %v60 = vld [vmem:[#allocation5 + $0x20] sm:$0xff]
    %v61 = vld [vmem:[#allocation5 + $0x28] sm:$0xff]
    %v62 = vld [vmem:[#allocation5 + $0x30] sm:$0xff]
    %v63 = vld [vmem:[#allocation5 + $0x38] sm:$0xff]
    %v64 = vld [vmem:[#allocation5 + $0x40] sm:$0xff]
    %v65 = vld [vmem:[#allocation5 + $0x48] sm:$0xff]
    %v66 = vld [vmem:[#allocation5 + $0x50] sm:$0xff]
    %v67 = vld [vmem:[#allocation5 + $0x58] sm:$0xff]
    %v68 = vld [vmem:[#allocation5 + $0x60] sm:$0xff]
    %v69 = vld [vmem:[#allocation5 + $0x68] sm:$0xff]
    %v70 = vld [vmem:[#allocation5 + $0x70] sm:$0xff]
    %v71 = vld [vmem:[#allocation5 + $0x78] sm:$0xff]
    %v72 = vmul.f32 %v40, %v40
    %v73 = vmul.f32 %v41, %v41
    %v74 = vmul.f32 %v42, %v42
    %v75 = vmul.f32 %v43, %v43
    %v76 = vmul.f32 %v44, %v44
    %v77 = vmul.f32 %v45, %v45
    %v78 = vmul.f32 %v46, %v46
    %v79 = vmul.f32 %v47, %v47
    %v80 = vmul.f32 %v48, %v48
    %v81 = vmul.f32 %v49, %v49
    %v82 = vmul.f32 %v50, %v50
    %v83 = vmul.f32 %v51, %v51
    %v84 = vmul.f32 %v52, %v52
    %v85 = vmul.f32 %v53, %v53
    %v86 = vmul.f32 %v54, %v54
    %v87 = vmul.f32 %v55, %v55
    %v88 = vadd.f32 %v72, %v73
    %v89 = vadd.f32 %v88, %v74
    %v90 = vadd.f32 %v89, %v75
    %v91 = vrot.slane %v90, 4
    %v92 = vadd.f32 %v90, %v91
    %v93 = vrot.slane %v92, 2
    %v94 = vadd.f32 %v92, %v93
    %v95 = vrot.slane %v94, 1
    %v96 = vadd.f32 %v94, %v95
    %v97 = vadd.f32 %v76, %v77
    %v98 = vadd.f32 %v97, %v78
    %v99 = vadd.f32 %v98, %v79
    %v100 = vrot.slane %v99, 4
    %v101 = vadd.f32 %v99, %v100
    %v102 = vrot.slane %v101, 2
    %v103 = vadd.f32 %v101, %v102
    %v104 = vrot.slane %v103, 1
    %v105 = vadd.f32 %v103, %v104
    %v106 = vadd.f32 %v80, %v81
    %v107 = vadd.f32 %v106, %v82
    %v108 = vadd.f32 %v107, %v83
    %v109 = vrot.slane %v108, 4
    %v110 = vadd.f32 %v108, %v109
    %v111 = vrot.slane %v110, 2
    %v112 = vadd.f32 %v110, %v111
    %v113 = vrot.slane %v112, 1
    %v114 = vadd.f32 %v112, %v113
    %v115 = vadd.f32 %v84, %v85
    %v116 = vadd.f32 %v115, %v86
    %v117 = vadd.f32 %v116, %v87
    %v118 = vrot.slane %v117, 4
    %v119 = vadd.f32 %v117, %v118
    %v120 = vrot.slane %v119, 2
    %v121 = vadd.f32 %v119, %v120
    %v122 = vrot.slane %v121, 1
    %v123 = vadd.f32 %v121, %v122
    %v124 = vmax.f32 %v96, 1e-24
    %v125 = vmax.f32 %v105, 1e-24
    %v126 = vmax.f32 %v114, 1e-24
    %v127 = vmax.f32 %v123, 1e-24
    %v128 = vrsqrt.pop %v124
    %v129 = vrsqrt.pop %v125
    %v130 = vrsqrt.pop %v126
    %v131 = vrsqrt.pop %v127
    %v132 = vmul.f32 %v40, %v128
    %v133 = vmul.f32 %v41, %v128
    %v134 = vmul.f32 %v42, %v128
    %v135 = vmul.f32 %v43, %v128
    %v136 = vmul.f32 %v44, %v129
    %v137 = vmul.f32 %v45, %v129
    %v138 = vmul.f32 %v46, %v129
    %v139 = vmul.f32 %v47, %v129
    %v140 = vmul.f32 %v48, %v130
    %v141 = vmul.f32 %v49, %v130
    %v142 = vmul.f32 %v50, %v130
    %v143 = vmul.f32 %v51, %v130
    %v144 = vmul.f32 %v52, %v131
    %v145 = vmul.f32 %v53, %v131
    %v146 = vmul.f32 %v54, %v131
    %v147 = vmul.f32 %v55, %v131
    %v148 = vmul.f32 %v56, %v56
    %v149 = vmul.f32 %v57, %v57
    %v150 = vmul.f32 %v58, %v58
    %v151 = vmul.f32 %v59, %v59
    %v152 = vmul.f32 %v60, %v60
    %v153 = vmul.f32 %v61, %v61
    %v154 = vmul.f32 %v62, %v62
    %v155 = vmul.f32 %v63, %v63
    %v156 = vmul.f32 %v64, %v64
    %v157 = vmul.f32 %v65, %v65
    %v158 = vmul.f32 %v66, %v66
    %v159 = vmul.f32 %v67, %v67
    %v160 = vmul.f32 %v68, %v68
    %v161 = vmul.f32 %v69, %v69
    %v162 = vmul.f32 %v70, %v70
    %v163 = vmul.f32 %v71, %v71
    %v164 = vadd.f32 %v148, %v149
    %v165 = vadd.f32 %v164, %v150
    %v166 = vadd.f32 %v165, %v151
    %v167 = vrot.slane %v166, 4
    %v168 = vadd.f32 %v166, %v167
    %v169 = vrot.slane %v168, 2
    %v170 = vadd.f32 %v168, %v169
    %v171 = vrot.slane %v170, 1
    %v172 = vadd.f32 %v170, %v171
    %v173 = vadd.f32 %v152, %v153
    %v174 = vadd.f32 %v173, %v154
    %v175 = vadd.f32 %v174, %v155
    %v176 = vrot.slane %v175, 4
    %v177 = vadd.f32 %v175, %v176
    %v178 = vrot.slane %v177, 2
    %v179 = vadd.f32 %v177, %v178
    %v180 = vrot.slane %v179, 1
    %v181 = vadd.f32 %v179, %v180
    %v182 = vadd.f32 %v156, %v157
    %v183 = vadd.f32 %v182, %v158
    %v184 = vadd.f32 %v183, %v159
    %v185 = vrot.slane %v184, 4
    %v186 = vadd.f32 %v184, %v185
    %v187 = vrot.slane %v186, 2
    %v188 = vadd.f32 %v186, %v187
    %v189 = vrot.slane %v188, 1
    %v190 = vadd.f32 %v188, %v189
    %v191 = vadd.f32 %v160, %v161
    %v192 = vadd.f32 %v191, %v162
    %v193 = vadd.f32 %v192, %v163
    %v194 = vrot.slane %v193, 4
    %v195 = vadd.f32 %v193, %v194
    %v196 = vrot.slane %v195, 2
    %v197 = vadd.f32 %v195, %v196
    %v198 = vrot.slane %v197, 1
    %v199 = vadd.f32 %v197, %v198
    %v200 = vmax.f32 %v172, 1e-24
    %v201 = vmax.f32 %v181, 1e-24
    %v202 = vmax.f32 %v190, 1e-24
    %v203 = vmax.f32 %v199, 1e-24
    %v204 = vrsqrt.pop %v200
    %v205 = vrsqrt.pop %v201
    %v206 = vrsqrt.pop %v202
    %v207 = vrsqrt.pop %v203
    %v208 = vmul.f32 %v56, %v204
    %v209 = vmul.f32 %v57, %v204
    %v210 = vmul.f32 %v58, %v204
    %v211 = vmul.f32 %v59, %v204
    %v212 = vmul.f32 %v60, %v205
    %v213 = vmul.f32 %v61, %v205
    %v214 = vmul.f32 %v62, %v205
    %v215 = vmul.f32 %v63, %v205
    %v216 = vmul.f32 %v64, %v206
    %v217 = vmul.f32 %v65, %v206
    %v218 = vmul.f32 %v66, %v206
    %v219 = vmul.f32 %v67, %v206
    %v220 = vmul.f32 %v68, %v207
    %v221 = vmul.f32 %v69, %v207
    %v222 = vmul.f32 %v70, %v207
    %v223 = vmul.f32 %v71, %v207
    %v224 = vadd.f32 %v132, %v136
    %v225 = vadd.f32 %v133, %v137
    %v226 = vadd.f32 %v134, %v138
    %v227 = vadd.f32 %v135, %v139
    %v228 = vadd.f32 %v224, %v140
    %v229 = vadd.f32 %v225, %v141
    %v230 = vadd.f32 %v226, %v142
    %v231 = vadd.f32 %v227, %v143
    %v232 = vadd.f32 %v228, %v144
    %v233 = vadd.f32 %v229, %v145
    %v234 = vadd.f32 %v230, %v146
    %v235 = vadd.f32 %v231, %v147
    %v236 = vadd.f32 %v208, %v212
    %v237 = vadd.f32 %v209, %v213
    %v238 = vadd.f32 %v210, %v214
    %v239 = vadd.f32 %v211, %v215
    %v240 = vadd.f32 %v236, %v216
    %v241 = vadd.f32 %v237, %v217
    %v242 = vadd.f32 %v238, %v218
    %v243 = vadd.f32 %v239, %v219
    %v244 = vadd.f32 %v240, %v220
    %v245 = vadd.f32 %v241, %v221
    %v246 = vadd.f32 %v242, %v222
    %v247 = vadd.f32 %v243, %v223
    %v248 = vsub.f32 %v232, %v132
    %v249 = vsub.f32 %v233, %v133
    %v250 = vsub.f32 %v234, %v134
    %v251 = vsub.f32 %v235, %v135
    %v252 = vsub.f32 %v232, %v136
    %v253 = vsub.f32 %v233, %v137
    %v254 = vsub.f32 %v234, %v138
    %v255 = vsub.f32 %v235, %v139
    %v256 = vsub.f32 %v232, %v140
    %v257 = vsub.f32 %v233, %v141
    %v258 = vsub.f32 %v234, %v142
    %v259 = vsub.f32 %v235, %v143
    %v260 = vsub.f32 %v232, %v144
    %v261 = vsub.f32 %v233, %v145
    %v262 = vsub.f32 %v234, %v146
    %v263 = vsub.f32 %v235, %v147
    %v264 = vmul.f32 %v132, %v248
    %v265 = vmul.f32 %v133, %v249
    %v266 = vmul.f32 %v134, %v250
    %v267 = vmul.f32 %v135, %v251
    %v268 = vmul.f32 %v136, %v252
    %v269 = vmul.f32 %v137, %v253
    %v270 = vmul.f32 %v138, %v254
    %v271 = vmul.f32 %v139, %v255
    %v272 = vmul.f32 %v140, %v256
    %v273 = vmul.f32 %v141, %v257
    %v274 = vmul.f32 %v142, %v258
    %v275 = vmul.f32 %v143, %v259
    %v276 = vmul.f32 %v144, %v260
    %v277 = vmul.f32 %v145, %v261
    %v278 = vmul.f32 %v146, %v262
    %v279 = vmul.f32 %v147, %v263
    %v280 = vadd.f32 %v264, %v265
    %v281 = vadd.f32 %v280, %v266
    %v282 = vadd.f32 %v281, %v267
    %v283 = vrot.slane %v282, 4
    %v284 = vadd.f32 %v282, %v283
    %v285 = vrot.slane %v284, 2
    %v286 = vadd.f32 %v284, %v285
    %v287 = vrot.slane %v286, 1
    %v288 = vadd.f32 %v286, %v287
    %v289 = vadd.f32 %v268, %v269
    %v290 = vadd.f32 %v289, %v270
    %v291 = vadd.f32 %v290, %v271
    %v292 = vrot.slane %v291, 4
    %v293 = vadd.f32 %v291, %v292
    %v294 = vrot.slane %v293, 2
    %v295 = vadd.f32 %v293, %v294
    %v296 = vrot.slane %v295, 1
    %v297 = vadd.f32 %v295, %v296
    %v298 = vadd.f32 %v272, %v273
    %v299 = vadd.f32 %v298, %v274
    %v300 = vadd.f32 %v299, %v275
    %v301 = vrot.slane %v300, 4
    %v302 = vadd.f32 %v300, %v301
    %v303 = vrot.slane %v302, 2
    %v304 = vadd.f32 %v302, %v303
    %v305 = vrot.slane %v304, 1
    %v306 = vadd.f32 %v304, %v305
    %v307 = vadd.f32 %v276, %v277
    %v308 = vadd.f32 %v307, %v278
    %v309 = vadd.f32 %v308, %v279
    %v310 = vrot.slane %v309, 4
    %v311 = vadd.f32 %v309, %v310
    %v312 = vrot.slane %v311, 2
    %v313 = vadd.f32 %v311, %v312
    %v314 = vrot.slane %v313, 1
    %v315 = vadd.f32 %v313, %v314
    %v316 = vmul.f32 %v288, 0.6666667
    %v317 = vmul.f32 %v297, 0.6666667
    %v318 = vmul.f32 %v306, 0.6666667
    %v319 = vmul.f32 %v315, 0.6666667
    %v320 = vmul.f32 %v316, 1.442695
    %v321 = vpow.pop %v320
    %v322 = vmul.f32 %v317, 1.442695
    %v323 = vpow.pop %v322
    %v324 = vmul.f32 %v318, 1.442695
    %v325 = vpow.pop %v324
    %v326 = vmul.f32 %v319, 1.442695
    %v327 = vpow.pop %v326
    %v328 = vsub.f32 %v244, %v208
    %v329 = vsub.f32 %v245, %v209
    %v330 = vsub.f32 %v246, %v210
    %v331 = vsub.f32 %v247, %v211
    %v332 = vsub.f32 %v244, %v212
    %v333 = vsub.f32 %v245, %v213
    %v334 = vsub.f32 %v246, %v214
    %v335 = vsub.f32 %v247, %v215
    %v336 = vsub.f32 %v244, %v216
    %v337 = vsub.f32 %v245, %v217
    %v338 = vsub.f32 %v246, %v218
    %v339 = vsub.f32 %v247, %v219
    %v340 = vsub.f32 %v244, %v220
    %v341 = vsub.f32 %v245, %v221
    %v342 = vsub.f32 %v246, %v222
    %v343 = vsub.f32 %v247, %v223
    %v344 = vmul.f32 %v208, %v328
    %v345 = vmul.f32 %v209, %v329
    %v346 = vmul.f32 %v210, %v330
    %v347 = vmul.f32 %v211, %v331
    %v348 = vmul.f32 %v212, %v332
    %v349 = vmul.f32 %v213, %v333
    %v350 = vmul.f32 %v214, %v334
    %v351 = vmul.f32 %v215, %v335
    %v352 = vmul.f32 %v216, %v336
    %v353 = vmul.f32 %v217, %v337
    %v354 = vmul.f32 %v218, %v338
    %v355 = vmul.f32 %v219, %v339
    %v356 = vmul.f32 %v220, %v340
    %v357 = vmul.f32 %v221, %v341
    %v358 = vmul.f32 %v222, %v342
    %v359 = vmul.f32 %v223, %v343
    %v360 = vadd.f32 %v344, %v345
    %v361 = vadd.f32 %v360, %v346
    %v362 = vadd.f32 %v361, %v347
    %v363 = vrot.slane %v362, 4
    %v364 = vadd.f32 %v362, %v363
    %v365 = vrot.slane %v364, 2
    %v366 = vadd.f32 %v364, %v365
    %v367 = vrot.slane %v366, 1
    %v368 = vadd.f32 %v366, %v367
    %v369 = vadd.f32 %v348, %v349
    %v370 = vadd.f32 %v369, %v350
    %v371 = vadd.f32 %v370, %v351
    %v372 = vrot.slane %v371, 4
    %v373 = vadd.f32 %v371, %v372
    %v374 = vrot.slane %v373, 2
    %v375 = vadd.f32 %v373, %v374
    %v376 = vrot.slane %v375, 1
    %v377 = vadd.f32 %v375, %v376
    %v378 = vadd.f32 %v352, %v353
    %v379 = vadd.f32 %v378, %v354
    %v380 = vadd.f32 %v379, %v355
    %v381 = vrot.slane %v380, 4
    %v382 = vadd.f32 %v380, %v381
    %v383 = vrot.slane %v382, 2
    %v384 = vadd.f32 %v382, %v383
    %v385 = vrot.slane %v384, 1
    %v386 = vadd.f32 %v384, %v385
    %v387 = vadd.f32 %v356, %v357
    %v388 = vadd.f32 %v387, %v358
    %v389 = vadd.f32 %v388, %v359
    %v390 = vrot.slane %v389, 4
    %v391 = vadd.f32 %v389, %v390
    %v392 = vrot.slane %v391, 2
    %v393 = vadd.f32 %v391, %v392
    %v394 = vrot.slane %v393, 1
    %v395 = vadd.f32 %v393, %v394
    %v396 = vmul.f32 %v368, 0.6666667
    %v397 = vmul.f32 %v377, 0.6666667
    %v398 = vmul.f32 %v386, 0.6666667
    %v399 = vmul.f32 %v395, 0.6666667
    %v400 = vmul.f32 %v396, 1.442695
    %v401 = vpow.pop %v400
    %v402 = vmul.f32 %v397, 1.442695
    %v403 = vpow.pop %v402
    %v404 = vmul.f32 %v398, 1.442695
    %v405 = vpow.pop %v404
    %v406 = vmul.f32 %v399, 1.442695
    %v407 = vpow.pop %v406
    %v408 = vmul.f32 %v132, %v208
    %v409 = vmul.f32 %v133, %v209
    %v410 = vmul.f32 %v134, %v210
    %v411 = vmul.f32 %v135, %v211
    %v412 = vmul.f32 %v136, %v208
    %v413 = vmul.f32 %v137, %v209
    %v414 = vmul.f32 %v138, %v210
    %v415 = vmul.f32 %v139, %v211
    %v416 = vmul.f32 %v140, %v208
    %v417 = vmul.f32 %v141, %v209
    %v418 = vmul.f32 %v142, %v210
    %v419 = vmul.f32 %v143, %v211
    %v420 = vmul.f32 %v144, %v208
    %v421 = vmul.f32 %v145, %v209
    %v422 = vmul.f32 %v146, %v210
    %v423 = vmul.f32 %v147, %v211
    %v424 = vadd.f32 %v408, %v409
    %v425 = vadd.f32 %v424, %v410
    %v426 = vadd.f32 %v425, %v411
    %v427 = vrot.slane %v426, 4
    %v428 = vadd.f32 %v426, %v427
    %v429 = vrot.slane %v428, 2
    %v430 = vadd.f32 %v428, %v429
    %v431 = vrot.slane %v430, 1
    %v432 = vadd.f32 %v430, %v431
    %v433 = vadd.f32 %v412, %v413
    %v434 = vadd.f32 %v433, %v414
    %v435 = vadd.f32 %v434, %v415
    %v436 = vrot.slane %v435, 4
    %v437 = vadd.f32 %v435, %v436
    %v438 = vrot.slane %v437, 2
    %v439 = vadd.f32 %v437, %v438
    %v440 = vrot.slane %v439, 1
    %v441 = vadd.f32 %v439, %v440
    %v442 = vadd.f32 %v416, %v417
    %v443 = vadd.f32 %v442, %v418
    %v444 = vadd.f32 %v443, %v419
    %v445 = vrot.slane %v444, 4
    %v446 = vadd.f32 %v444, %v445
    %v447 = vrot.slane %v446, 2
    %v448 = vadd.f32 %v446, %v447
    %v449 = vrot.slane %v448, 1
    %v450 = vadd.f32 %v448, %v449
    %v451 = vadd.f32 %v420, %v421
    %v452 = vadd.f32 %v451, %v422
    %v453 = vadd.f32 %v452, %v423
    %v454 = vrot.slane %v453, 4
    %v455 = vadd.f32 %v453, %v454
    %v456 = vrot.slane %v455, 2
    %v457 = vadd.f32 %v455, %v456
    %v458 = vrot.slane %v457, 1
    %v459 = vadd.f32 %v457, %v458
    %v460 = vmul.f32 %v432, 2.0
    %v461 = vmul.f32 %v441, 2.0
    %v462 = vmul.f32 %v450, 2.0
    %v463 = vmul.f32 %v459, 2.0
    %v464 = vmul.f32 %v460, 1.442695
    %v465 = vpow.pop %v464
    %v466 = vmul.f32 %v461, 1.442695
    %v467 = vpow.pop %v466
    %v468 = vmul.f32 %v462, 1.442695
    %v469 = vpow.pop %v468
    %v470 = vmul.f32 %v463, 1.442695
    %v471 = vpow.pop %v470
    %v472 = vadd.f32 %v465, 0.0
    %v473 = vadd.f32 %v467, 0.0
    %v474 = vadd.f32 %v469, 0.0
    %v475 = vadd.f32 %v471, 0.0
    %v476 = vadd.f32 %v465, %v467
    %v477 = vadd.f32 %v476, %v469
    %v478 = vadd.f32 %v477, %v471
    %v479 = vadd.f32 %v401, %v478
    %v480 = vrcp.pop %v479
    %v481 = vmul.f32 %v401, %v480
    %v482 = vadd.f32 %v481, 0.0
    %v483 = vmul.f32 %v132, %v212
    %v484 = vmul.f32 %v133, %v213
    %v485 = vmul.f32 %v134, %v214
    %v486 = vmul.f32 %v135, %v215
    %v487 = vmul.f32 %v136, %v212
    %v488 = vmul.f32 %v137, %v213
    %v489 = vmul.f32 %v138, %v214
    %v490 = vmul.f32 %v139, %v215
    %v491 = vmul.f32 %v140, %v212
    %v492 = vmul.f32 %v141, %v213
    %v493 = vmul.f32 %v142, %v214
    %v494 = vmul.f32 %v143, %v215
    %v495 = vmul.f32 %v144, %v212
    %v496 = vmul.f32 %v145, %v213
    %v497 = vmul.f32 %v146, %v214
    %v498 = vmul.f32 %v147, %v215
    %v499 = vadd.f32 %v483, %v484
    %v500 = vadd.f32 %v499, %v485
    %v501 = vadd.f32 %v500, %v486
    %v502 = vrot.slane %v501, 4
    %v503 = vadd.f32 %v501, %v502
    %v504 = vrot.slane %v503, 2
    %v505 = vadd.f32 %v503, %v504
    %v506 = vrot.slane %v505, 1
    %v507 = vadd.f32 %v505, %v506
    %v508 = vadd.f32 %v487, %v488
    %v509 = vadd.f32 %v508, %v489
    %v510 = vadd.f32 %v509, %v490
    %v511 = vrot.slane %v510, 4
    %v512 = vadd.f32 %v510, %v511
    %v513 = vrot.slane %v512, 2
    %v514 = vadd.f32 %v512, %v513
    %v515 = vrot.slane %v514, 1
    %v516 = vadd.f32 %v514, %v515
    %v517 = vadd.f32 %v491, %v492
    %v518 = vadd.f32 %v517, %v493
    %v519 = vadd.f32 %v518, %v494
    %v520 = vrot.slane %v519, 4
    %v521 = vadd.f32 %v519, %v520
    %v522 = vrot.slane %v521, 2
    %v523 = vadd.f32 %v521, %v522
    %v524 = vrot.slane %v523, 1
    %v525 = vadd.f32 %v523, %v524
    %v526 = vadd.f32 %v495, %v496
    %v527 = vadd.f32 %v526, %v497
    %v528 = vadd.f32 %v527, %v498
    %v529 = vrot.slane %v528, 4
    %v530 = vadd.f32 %v528, %v529
    %v531 = vrot.slane %v530, 2
    %v532 = vadd.f32 %v530, %v531
    %v533 = vrot.slane %v532, 1
    %v534 = vadd.f32 %v532, %v533
    %v535 = vmul.f32 %v507, 2.0
    %v536 = vmul.f32 %v516, 2.0
    %v537 = vmul.f32 %v525, 2.0
    %v538 = vmul.f32 %v534, 2.0
    %v539 = vmul.f32 %v535, 1.442695
    %v540 = vpow.pop %v539
    %v541 = vmul.f32 %v536, 1.442695
    %v542 = vpow.pop %v541
    %v543 = vmul.f32 %v537, 1.442695
    %v544 = vpow.pop %v543
    %v545 = vmul.f32 %v538, 1.442695
    %v546 = vpow.pop %v545
    %v547 = vadd.f32 %v472, %v540
    %v548 = vadd.f32 %v473, %v542
    %v549 = vadd.f32 %v474, %v544
    %v550 = vadd.f32 %v475, %v546
    %v551 = vadd.f32 %v540, %v542
    %v552 = vadd.f32 %v551, %v544
    %v553 = vadd.f32 %v552, %v546
    %v554 = vadd.f32 %v403, %v553
    %v555 = vrcp.pop %v554
    %v556 = vmul.f32 %v403, %v555
    %v557 = vadd.f32 %v482, %v556
    %v558 = vmul.f32 %v132, %v216
    %v559 = vmul.f32 %v133, %v217
    %v560 = vmul.f32 %v134, %v218
    %v561 = vmul.f32 %v135, %v219
    %v562 = vmul.f32 %v136, %v216
    %v563 = vmul.f32 %v137, %v217
    %v564 = vmul.f32 %v138, %v218
    %v565 = vmul.f32 %v139, %v219
    %v566 = vmul.f32 %v140, %v216
    %v567 = vmul.f32 %v141, %v217
    %v568 = vmul.f32 %v142, %v218
    %v569 = vmul.f32 %v143, %v219
    %v570 = vmul.f32 %v144, %v216
    %v571 = vmul.f32 %v145, %v217
    %v572 = vmul.f32 %v146, %v218
    %v573 = vmul.f32 %v147, %v219
    %v574 = vadd.f32 %v558, %v559
    %v575 = vadd.f32 %v574, %v560
    %v576 = vadd.f32 %v575, %v561
    %v577 = vrot.slane %v576, 4
    %v578 = vadd.f32 %v576, %v577
    %v579 = vrot.slane %v578, 2
    %v580 = vadd.f32 %v578, %v579
    %v581 = vrot.slane %v580, 1
    %v582 = vadd.f32 %v580, %v581
    %v583 = vadd.f32 %v562, %v563
    %v584 = vadd.f32 %v583, %v564
    %v585 = vadd.f32 %v584, %v565
    %v586 = vrot.slane %v585, 4
    %v587 = vadd.f32 %v585, %v586
    %v588 = vrot.slane %v587, 2
    %v589 = vadd.f32 %v587, %v588
    %v590 = vrot.slane %v589, 1
    %v591 = vadd.f32 %v589, %v590
    %v592 = vadd.f32 %v566, %v567
    %v593 = vadd.f32 %v592, %v568
    %v594 = vadd.f32 %v593, %v569
    %v595 = vrot.slane %v594, 4
    %v596 = vadd.f32 %v594, %v595
    %v597 = vrot.slane %v596, 2
    %v598 = vadd.f32 %v596, %v597
    %v599 = vrot.slane %v598, 1
    %v600 = vadd.f32 %v598, %v599
    %v601 = vadd.f32 %v570, %v571
    %v602 = vadd.f32 %v601, %v572
    %v603 = vadd.f32 %v602, %v573
    %v604 = vrot.slane %v603, 4
    %v605 = vadd.f32 %v603, %v604
    %v606 = vrot.slane %v605, 2
    %v607 = vadd.f32 %v605, %v606
    %v608 = vrot.slane %v607, 1
    %v609 = vadd.f32 %v607, %v608
    %v610 = vmul.f32 %v582, 2.0
    %v611 = vmul.f32 %v591, 2.0
    %v612 = vmul.f32 %v600, 2.0
    %v613 = vmul.f32 %v609, 2.0
    %v614 = vmul.f32 %v610, 1.442695
    %v615 = vpow.pop %v614
    %v616 = vmul.f32 %v611, 1.442695
    %v617 = vpow.pop %v616
    %v618 = vmul.f32 %v612, 1.442695
    %v619 = vpow.pop %v618
    %v620 = vmul.f32 %v613, 1.442695
    %v621 = vpow.pop %v620
    %v622 = vadd.f32 %v547, %v615
    %v623 = vadd.f32 %v548, %v617
    %v624 = vadd.f32 %v549, %v619
    %v625 = vadd.f32 %v550, %v621
    %v626 = vadd.f32 %v615, %v617
    %v627 = vadd.f32 %v626, %v619
    %v628 = vadd.f32 %v627, %v621
    %v629 = vadd.f32 %v405, %v628
    %v630 = vrcp.pop %v629
    %v631 = vmul.f32 %v405, %v630
    %v632 = vadd.f32 %v557, %v631
    %v633 = vmul.f32 %v132, %v220
    %v634 = vmul.f32 %v133, %v221
    %v635 = vmul.f32 %v134, %v222
    %v636 = vmul.f32 %v135, %v223
    %v637 = vmul.f32 %v136, %v220
    %v638 = vmul.f32 %v137, %v221
    %v639 = vmul.f32 %v138, %v222
    %v640 = vmul.f32 %v139, %v223
    %v641 = vmul.f32 %v140, %v220
    %v642 = vmul.f32 %v141, %v221
    %v643 = vmul.f32 %v142, %v222
    %v644 = vmul.f32 %v143, %v223
    %v645 = vmul.f32 %v144, %v220
    %v646 = vmul.f32 %v145, %v221
    %v647 = vmul.f32 %v146, %v222
    %v648 = vmul.f32 %v147, %v223
    %v649 = vadd.f32 %v633, %v634
    %v650 = vadd.f32 %v649, %v635
    %v651 = vadd.f32 %v650, %v636
    %v652 = vrot.slane %v651, 4
    %v653 = vadd.f32 %v651, %v652
    %v654 = vrot.slane %v653, 2
    %v655 = vadd.f32 %v653, %v654
    %v656 = vrot.slane %v655, 1
    %v657 = vadd.f32 %v655, %v656
    %v658 = vadd.f32 %v637, %v638
    %v659 = vadd.f32 %v658, %v639
    %v660 = vadd.f32 %v659, %v640
    %v661 = vrot.slane %v660, 4
    %v662 = vadd.f32 %v660, %v661
    %v663 = vrot.slane %v662, 2
    %v664 = vadd.f32 %v662, %v663
    %v665 = vrot.slane %v664, 1
    %v666 = vadd.f32 %v664, %v665
    %v667 = vadd.f32 %v641, %v642
    %v668 = vadd.f32 %v667, %v643
    %v669 = vadd.f32 %v668, %v644
    %v670 = vrot.slane %v669, 4
    %v671 = vadd.f32 %v669, %v670
    %v672 = vrot.slane %v671, 2
    %v673 = vadd.f32 %v671, %v672
    %v674 = vrot.slane %v673, 1
    %v675 = vadd.f32 %v673, %v674
    %v676 = vadd.f32 %v645, %v646
    %v677 = vadd.f32 %v676, %v647
    %v678 = vadd.f32 %v677, %v648
    %v679 = vrot.slane %v678, 4
    %v680 = vadd.f32 %v678, %v679
    %v681 = vrot.slane %v680, 2
    %v682 = vadd.f32 %v680, %v681
    %v683 = vrot.slane %v682, 1
    %v684 = vadd.f32 %v682, %v683
    %v685 = vmul.f32 %v657, 2.0
    %v686 = vmul.f32 %v666, 2.0
    %v687 = vmul.f32 %v675, 2.0
    %v688 = vmul.f32 %v684, 2.0
    %v689 = vmul.f32 %v685, 1.442695
    %v690 = vpow.pop %v689
    %v691 = vmul.f32 %v686, 1.442695
    %v692 = vpow.pop %v691
    %v693 = vmul.f32 %v687, 1.442695
    %v694 = vpow.pop %v693
    %v695 = vmul.f32 %v688, 1.442695
    %v696 = vpow.pop %v695
    %v697 = vadd.f32 %v622, %v690
    %v698 = vadd.f32 %v623, %v692
    %v699 = vadd.f32 %v624, %v694
    %v700 = vadd.f32 %v625, %v696
    %v701 = vadd.f32 %v690, %v692
    %v702 = vadd.f32 %v701, %v694
    %v703 = vadd.f32 %v702, %v696
    %v704 = vadd.f32 %v407, %v703
    %v705 = vrcp.pop %v704
    %v706 = vmul.f32 %v407, %v705
    %v707 = vadd.f32 %v632, %v706
    %v708 = vadd.f32 %v321, %v697
    %v709 = vadd.f32 %v323, %v698
    %v710 = vadd.f32 %v325, %v699
    %v711 = vadd.f32 %v327, %v700
    %v712 = vrcp.pop %v708
    %v713 = vmul.f32 %v321, %v712
    %v714 = vrcp.pop %v709
    %v715 = vmul.f32 %v323, %v714
    %v716 = vrcp.pop %v710
    %v717 = vmul.f32 %v325, %v716
    %v718 = vrcp.pop %v711
    %v719 = vmul.f32 %v327, %v718
    %v720 = vadd.f32 %v713, %v715
    %v721 = vadd.f32 %v720, %v717
    %v722 = vadd.f32 %v721, %v719
    %v723 = vadd.f32 %v722, %v707
    %v724 = vmul.f32 %v723, 0.125
    %v725 = vlog2.pop %v724
    %v726 = vmul.f32 %v725, 0.6931472
    %v727 = vsub.f32 0.0, %v726
    %728 = vst [vmem:[#allocation7] sm:$0x1] %v727
    // Predicated region
    $region18: #{tpu_custom_call.1} parent=1 // pred_check
      _
    $region19: #{tpu_custom_call.1} parent=1 // pred_check_branch
      %730 = sbr.rel (0) target = $region21
    $region20: #{tpu_custom_call.1} parent=1 // pred_region
      %s732 = ssub.s32 16, 16
      %733 = vsyncadd [#allocation4], %s732
      %s735 = sshll.u32 [#allocation7], 4
      %s736 = int_to_ptr.vmem [resolvable:$true] %s735
      %738 = dma.vmem_to_hbm [thread:$0]  %s736, 16, %s2, [#allocation4]
    $region21: #{tpu_custom_call.1} parent=1 // pred_fallthru
      _
    // Predicated region
    $region22: #{tpu_custom_call.1} parent=1 // pred_check
      _
    $region23: #{tpu_custom_call.1} parent=1 // pred_check_branch
      %740 = sbr.rel (0) target = $region25
    $region24: #{tpu_custom_call.1} parent=1 // pred_region
      %741 = dma.done [#allocation4], 16
    $region25: #{tpu_custom_call.1} parent=1 // pred_fallthru
      _
    %742 = vsyncpa [#allocation3], 1
    %743 = vsyncpa [#allocation6], 1
    %744 = vsyncpa [#allocation4], 1

</llo_original>
